<compile_context>
chip_gen: v6e
topology: v6e:2x2x1
jax: 0.10.0
libtpu: 0.0.40
codegen_flags: <defaults>
</compile_context>

<pallas_src>
import math
import functools

import jax
import jax.numpy as jnp
from jax import lax
from jax.experimental import pallas as pl
from jax.experimental.pallas import tpu as pltpu

_EPS = 1e-5


@functools.lru_cache(maxsize=None)
def _vmem_limit_bytes():
    phys = 128 * 1024 * 1024
    try:
        info = pltpu.get_tpu_info()
        phys = int(getattr(info, "vmem_capacity_bytes", phys))
    except Exception:
        pass
    # ~20% headroom for compiler scratch / spills (important on v7x's 64 MiB),
    # capped near 110 MiB on 128 MiB parts (v5e / v6e).
    return min(int(phys * 0.8), 110 * 1024 * 1024)


def _cparams(semantics):
    return pltpu.CompilerParams(dimension_semantics=semantics,
                                vmem_limit_bytes=_vmem_limit_bytes())


def _pick_tile(n, targets):
    """Largest target tile that divides n (all targets are multiples of 8)."""
    for t in targets:
        if t <= n and n % t == 0:
            return t
    return n


def _is_f32(dt):
    return jnp.dtype(dt) == jnp.dtype(jnp.float32)


# --------------------------------------------------------------------------- #
# 1) per-row-tile partial sum / sum-of-squares (BN1 stats)
# --------------------------------------------------------------------------- #
def _stats_kernel(x_ref, psum_ref, psq_ref):
    x = x_ref[...].astype(jnp.float32)                     # (TM, E)
    psum_ref[0] = jnp.sum(x, axis=0, keepdims=True)
    psq_ref[0] = jnp.sum(x * x, axis=0, keepdims=True)


def _bn_stats(x2d):
    N, E = x2d.shape
    TM = _pick_tile(N, (512, 256, 128, 64, 32, 16, 8))
    nt = N // TM
    ps, pq = pl.pallas_call(
        _stats_kernel,
        grid=(nt,),
        in_specs=[pl.BlockSpec((TM, E), lambda i: (i, 0))],
        out_specs=[pl.BlockSpec((1, 1, E), lambda i: (i, 0, 0)),
                   pl.BlockSpec((1, 1, E), lambda i: (i, 0, 0))],
        out_shape=[jax.ShapeDtypeStruct((nt, 1, E), jnp.float32),
                   jax.ShapeDtypeStruct((nt, 1, E), jnp.float32)],
        compiler_params=_cparams(("parallel",)),
    )(x2d)
    # Tiny final reduction in JAX (num_tiles x E).
    return (jnp.sum(ps[:, 0, :], axis=0, keepdims=True),
            jnp.sum(pq[:, 0, :], axis=0, keepdims=True))


# --------------------------------------------------------------------------- #
# 2) fused BN1 normalize + QKV + multi-head attention + out-proj + residual
#    + BN2 partial-statistics epilogue (x1 never re-read for stats)
# --------------------------------------------------------------------------- #
def _bn1_attn_kernel(n_rows, num_heads, matmul_dtype,
                     x_ref, sum_ref, sq_ref, g_ref, b_ref,
                     wqkv_ref, bqkv_ref, wo_ref, bo_ref,
                     x1_ref, psum_ref, psq_ref, o_sc):
    _, S, E = x_ref.shape
    H = num_heads
    Dh = E // H
    scale = 1.0 / math.sqrt(Dh)
    exact = _is_f32(matmul_dtype)

    inv_n = 1.0 / n_rows
    x = x_ref[0].astype(jnp.float32)                       # (S, E)
    mean = sum_ref[...] * inv_n                            # (1, E)
    var = jnp.maximum(sq_ref[...] * inv_n - mean * mean, 0.0)   # clamp one-pass var
    bn = lax.rsqrt(var + _EPS) * g_ref[...]
    xn = (x - mean) * bn + b_ref[...]                      # (S, E) f32 residual stream

    # Fused (E, 3E) in-projection; result stays in VMEM (no HBM round-trip).
    qkv = jnp.dot(xn.astype(matmul_dtype), wqkv_ref[...],
                  preferred_element_type=jnp.float32) + bqkv_ref[...]   # (S, 3E) f32
    q = qkv[:, 0 * E:1 * E].astype(matmul_dtype)
    k = qkv[:, 1 * E:2 * E].astype(matmul_dtype)
    v = qkv[:, 2 * E:3 * E].astype(matmul_dtype)

    # TODO(synk): for large H*S turn this static head loop into a head-batched
    #             dot_general / flash-tiled loop to bound live ranges and VMEM.
    for h in range(H):
        cs = slice(h * Dh, (h + 1) * Dh)
        s = lax.dot_general(q[:, cs], k[:, cs], (((1,), (1,)), ((), ())),
                            preferred_element_type=jnp.float32) * scale  # (S, S)
        s = s - jnp.max(s, axis=-1, keepdims=True)
        p = jnp.exp(s)
        d = jnp.sum(p, axis=-1, keepdims=True)
        if exact:
            p = p / d
        else:
            p = p * pl.reciprocal(d, approx=True)
        oh = jnp.dot(p.astype(matmul_dtype), v[:, cs],
                     preferred_element_type=jnp.float32)                 # (S, Dh)
        o_sc[:, cs] = oh.astype(o_sc.dtype)                # assemble heads in VMEM

    # Single full-contraction out-projection (one (S,E)@(E,E) MXU pass).
    attn = jnp.dot(o_sc[...], wo_ref[...],
                   preferred_element_type=jnp.float32) + bo_ref[...]

    x1 = xn + attn
    x1_ref[0] = x1.astype(x1_ref.dtype)                    # lane-dense (S, E) store
    # BN2 partial stats while x1 is still resident in VMEM.
    psum_ref[0] = jnp.sum(x1, axis=0, keepdims=True)
    psq_ref[0] = jnp.sum(x1 * x1, axis=0, keepdims=True)


def _bn1_attn(x, s1, sq1, g1, b1, wqkv, bqkv, wo, bo, num_heads, matmul_dtype):
    B, S, E = x.shape
    row = lambda b: (b, 0, 0)
    vec = lambda b: (0, 0)
    kernel = functools.partial(_bn1_attn_kernel, B * S, num_heads, matmul_dtype)
    return pl.pallas_call(
        kernel,
        grid=(B,),
        in_specs=[pl.BlockSpec((1, S, E), row),
                  pl.BlockSpec((1, E), vec), pl.BlockSpec((1, E), vec),
                  pl.BlockSpec((1, E), vec), pl.BlockSpec((1, E), vec),
                  pl.BlockSpec((E, 3 * E), vec), pl.BlockSpec((1, 3 * E), vec),
                  pl.BlockSpec((E, E), vec), pl.BlockSpec((1, E), vec)],
        out_specs=[pl.BlockSpec((1, S, E), row),
                   pl.BlockSpec((1, 1, E), row),
                   pl.BlockSpec((1, 1, E), row)],
        out_shape=[jax.ShapeDtypeStruct((B, S, E), jnp.float32),
                   jax.ShapeDtypeStruct((B, 1, E), jnp.float32),
                   jax.ShapeDtypeStruct((B, 1, E), jnp.float32)],
        scratch_shapes=[pltpu.VMEM((S, E), matmul_dtype)],
        compiler_params=_cparams(("parallel",)),
    )(x, s1, sq1, g1, b1, wqkv, bqkv, wo, bo)


# --------------------------------------------------------------------------- #
# 3) BN2 normalize + FFN (F chunked on a reduction grid axis) + residual
# --------------------------------------------------------------------------- #
def _bn2_ffn_kernel(n_rows, matmul_dtype,
                    x_ref, sum_ref, sq_ref, g_ref, b_ref,
                    w1_ref, bf1_ref, w2_ref, bf2_ref, out_ref,
                    xn_sc, acc_sc):
    kf = pl.program_id(1)

    @pl.when(kf == 0)
    def _():
        inv_n = 1.0 / n_rows
        x = x_ref[...].astype(jnp.float32)                 # (TM, E)
        mean = sum_ref[...] * inv_n
        var = jnp.maximum(sq_ref[...] * inv_n - mean * mean, 0.0)
        bn = lax.rsqrt(var + _EPS) * g_ref[...]
        xn_sc[...] = (x - mean) * bn + b_ref[...]
        acc_sc[...] = jnp.zeros_like(acc_sc)

    h = jnp.dot(xn_sc[...].astype(matmul_dtype), w1_ref[...],
                preferred_element_type=jnp.float32) + bf1_ref[...]       # (TM, TF)
    h = jnp.maximum(h, 0.0)
    acc_sc[...] += jnp.dot(h.astype(matmul_dtype), w2_ref[...],
                           preferred_element_type=jnp.float32)           # (TM, E)

    @pl.when(kf == pl.num_programs(1) - 1)
    def _():
        out_ref[...] = (xn_sc[...] + acc_sc[...] + bf2_ref[...]).astype(out_ref.dtype)


def _bn2_ffn(x1_2d, s2, sq2, g2, b2, w1, bf1, w2, bf2, matmul_dtype):
    N, E = x1_2d.shape
    F = w1.shape[1]
    TM = _pick_tile(N, (256, 128, 64, 32, 16, 8))          # MXU-sized row tiles
    TF = _pick_tile(F, (512, 256, 128))                    # hidden-dim chunks
    nr, nf = N // TM, F // TF
    kernel = functools.partial(_bn2_ffn_kernel, N, matmul_dtype)
    rows = lambda i, k: (i, 0)
    vec = lambda i, k: (0, 0)
    return pl.pallas_call(
        kernel,
        grid=(nr, nf),
        in_specs=[pl.BlockSpec((TM, E), rows),
                  pl.BlockSpec((1, E), vec), pl.BlockSpec((1, E), vec),
                  pl.BlockSpec((1, E), vec), pl.BlockSpec((1, E), vec),
                  pl.BlockSpec((E, TF), lambda i, k: (0, k)),
                  pl.BlockSpec((1, TF), lambda i, k: (0, k)),
                  pl.BlockSpec((TF, E), lambda i, k: (k, 0)),
                  pl.BlockSpec((1, E), vec)],
        out_specs=pl.BlockSpec((TM, E), rows),
        out_shape=jax.ShapeDtypeStruct((N, E), jnp.float32),
        scratch_shapes=[pltpu.VMEM((TM, E), jnp.float32),
                        pltpu.VMEM((TM, E), jnp.float32)],
        compiler_params=_cparams(("parallel", "arbitrary")),
    )(x1_2d, s2, sq2, g2, b2, w1, bf1, w2, bf2)


# --------------------------------------------------------------------------- #
# wrapper
# --------------------------------------------------------------------------- #
def encoder_layer_forward(src, params, num_heads, matmul_dtype=jnp.bfloat16):
    """TransformerBatchNormEncoderLayer forward (train-mode BN, dropout p=0)."""
    src = src.astype(jnp.float32)
    B, S, E = src.shape
    N = B * S

    # Fuse the three in-projections into a single (E, 3E) matmul.
    wqkv = jnp.concatenate([params["wq"], params["wk"], params["wv"]],
                           axis=1).astype(matmul_dtype)
    bqkv = jnp.concatenate([params["bq"], params["bk"], params["bv"]], axis=1)
    wo = params["wo"].astype(matmul_dtype)
    w1 = params["w1"].astype(matmul_dtype)
    w2 = params["w2"].astype(matmul_dtype)

    # BN1 statistics (parallel per-tile partials + tiny JAX reduce).
    s1, sq1 = _bn_stats(src.reshape(N, E))

    # Fused BN1 + QKV + attention + residual; also emits BN2 partial stats.
    x1, ps2, pq2 = _bn1_attn(src, s1, sq1, params["g1"], params["b1"],
                             wqkv, bqkv, wo, params["bo"], num_heads, matmul_dtype)
    s2 = jnp.sum(ps2[:, 0, :], axis=0, keepdims=True)
    sq2 = jnp.sum(pq2[:, 0, :], axis=0, keepdims=True)

    # BN2 + FFN + residual over MXU-sized row tiles with F chunking.
    out = _bn2_ffn(x1.reshape(N, E), s2, sq2, params["g2"], params["b2"],
                   w1, params["bf1"], w2, params["bf2"], matmul_dtype)
    return out.reshape(B, S, E)


# --------------------------------------------------------------------------- #
# pure-JAX reference (mirrors the PyTorch forward; train-mode BN, no dropout)
# --------------------------------------------------------------------------- #
def reference_forward(src, params, num_heads):
    eps = 1e-5
    B, S, E = src.shape
    H = num_heads
    Dh = E // H
    x = src.reshape(B * S, E).astype(jnp.float32)

    m1 = jnp.mean(x, axis=0, keepdims=True)
    v1 = jnp.mean((x - m1) ** 2, axis=0, keepdims=True)
    xn = (x - m1) / jnp.sqrt(v1 + eps) * params["g1"] + params["b1"]

    q = (xn @ params["wq"] + params["bq"]).reshape(B, S, H, Dh)
    k = (xn @ params["wk"] + params["bk"]).reshape(B, S, H, Dh)
    v = (xn @ params["wv"] + params["bv"]).reshape(B, S, H, Dh)
    s = jnp.einsum("bqhd,bkhd->bhqk", q, k) / math.sqrt(Dh)
    p = jax.nn.softmax(s, axis=-1)
    o = jnp.einsum("bhqk,bkhd->bqhd", p, v).reshape(B * S, E)
    attn = o @ params["wo"] + params["bo"]

    x1 = xn + attn
    m2 = jnp.mean(x1, axis=0, keepdims=True)
    v2 = jnp.mean((x1 - m2) ** 2, axis=0, keepdims=True)
    x2n = (x1 - m2) / jnp.sqrt(v2 + eps) * params["g2"] + params["b2"]

    hdn = jax.nn.relu(x2n @ params["w1"] + params["bf1"])
    ff = hdn @ params["w2"] + params["bf2"]
    return (x2n + ff).reshape(B, S, E)


def make_params(key, dim_encoder, d_ff):
    E, F = dim_encoder, d_ff
    ks = jax.random.split(key, 16)
    n = lambda k, shape, s=0.1: s * jax.random.normal(k, shape, jnp.float32)
    return dict(
        g1=1.0 + n(ks[0], (1, E)), b1=n(ks[1], (1, E)),
        wq=n(ks[2], (E, E)), bq=n(ks[3], (1, E)),
        wk=n(ks[4], (E, E)), bk=n(ks[5], (1, E)),
        wv=n(ks[6], (E, E)), bv=n(ks[7], (1, E)),
        wo=n(ks[8], (E, E)), bo=n(ks[9], (1, E)),
        g2=1.0 + n(ks[10], (1, E)), b2=n(ks[11], (1, E)),
        w1=n(ks[12], (E, F)), bf1=n(ks[13], (1, F)),
        w2=n(ks[14], (F, E)), bf2=n(ks[15], (1, E)),
    )


if __name__ == "__main__":
    B, S, E, H, F = 2, 8, 32, 4, 64   # batch, seq, dim_encoder, num_heads, d_ff

    key = jax.random.PRNGKey(0)
    k_src, k_par = jax.random.split(key)
    src = jax.random.normal(k_src, (B, S, E), jnp.float32)
    params = make_params(k_par, E, F)

    ref = reference_forward(src, params, H)

    # f32 MXU operands: tight check against the pure-JAX reference.
    out_f32 = jax.block_until_ready(
        encoder_layer_forward(src, params, H, matmul_dtype=jnp.float32))
    assert out_f32.shape == (B, S, E)
    assert bool(jnp.allclose(out_f32, ref, atol=1e-2, rtol=1e-2)), "f32 mismatch"

    # bf16 MXU operands (f32 accumulation; BN/softmax/residual in f32): loose check.
    out_bf16 = jax.block_until_ready(
        encoder_layer_forward(src, params, H, matmul_dtype=jnp.bfloat16))
    assert out_bf16.shape == (B, S, E)
    assert bool(jnp.allclose(out_bf16, ref, atol=5e-2, rtol=5e-2)), "bf16 mismatch"

    print("KERNEL_OK")
</pallas_src>

<mosaic_0001>
module attributes {stable_mosaic.version = 11 : i64} {
  func.func @_stats_kernel(%arg0: i32, %arg1: memref<16x32xf32, #tpu.memory_space<vmem>>, %arg2: memref<1x1x32xf32, #tpu.memory_space<vmem>>, %arg3: memref<1x1x32xf32, #tpu.memory_space<vmem>>) attributes {dimension_semantics = [#tpu.dimension_semantics<parallel>], iteration_bounds = array<i64: 1>, scalar_prefetch = 0 : i64, scratch_operands = 0 : i64, tpu.core_type = #tpu.core_type<tc>, window_params = [{transform_indices = @transform_0, window_bounds = array<i64: 16, 32>}, {transform_indices = @transform_1, window_bounds = array<i64: 1, 1, 32>}, {transform_indices = @transform_2, window_bounds = array<i64: 1, 1, 32>}]} {
    %c0 = arith.constant 0 : index
    %c0_0 = arith.constant 0 : index
    %0 = vector.load %arg1[%c0, %c0_0] : memref<16x32xf32, #tpu.memory_space<vmem>>, vector<16x32xf32>
    %cst = arith.constant dense<0.000000e+00> : vector<32xf32>
    %1 = vector.multi_reduction <add>, %0, %cst [0] : vector<16x32xf32> to vector<32xf32>
    %2 = vector.shape_cast %1 : vector<32xf32> to vector<1x32xf32>
    %c0_1 = arith.constant 0 : index
    %c0_2 = arith.constant 0 : index
    %c0_3 = arith.constant 0 : index
    %3 = vector.load %arg2[%c0_1, %c0_2, %c0_3] : memref<1x1x32xf32, #tpu.memory_space<vmem>>, vector<1x1x32xf32>
    %4 = vector.shape_cast %3 : vector<1x1x32xf32> to vector<1x32xf32>
    %5 = vector.shape_cast %2 : vector<1x32xf32> to vector<1x1x32xf32>
    tpu.vector_store %arg2[%c0_1, %c0_2, %c0_3], %5 {strides = array<i32>} : memref<1x1x32xf32, #tpu.memory_space<vmem>>, vector<1x1x32xf32>,
    %6 = arith.mulf %0, %0 : vector<16x32xf32>
    %cst_4 = arith.constant dense<0.000000e+00> : vector<32xf32>
    %7 = vector.multi_reduction <add>, %6, %cst_4 [0] : vector<16x32xf32> to vector<32xf32>
    %8 = vector.shape_cast %7 : vector<32xf32> to vector<1x32xf32>
    %c0_5 = arith.constant 0 : index
    %c0_6 = arith.constant 0 : index
    %c0_7 = arith.constant 0 : index
    %9 = vector.load %arg3[%c0_5, %c0_6, %c0_7] : memref<1x1x32xf32, #tpu.memory_space<vmem>>, vector<1x1x32xf32>
    %10 = vector.shape_cast %9 : vector<1x1x32xf32> to vector<1x32xf32>
    %11 = vector.shape_cast %8 : vector<1x32xf32> to vector<1x1x32xf32>
    tpu.vector_store %arg3[%c0_5, %c0_6, %c0_7], %11 {strides = array<i32>} : memref<1x1x32xf32, #tpu.memory_space<vmem>>, vector<1x1x32xf32>,
    return
  }
  func.func @transform_0(%arg0: i32) -> (i32, i32) {
    %c0_i32 = arith.constant 0 : i32
    %c0_i32_0 = arith.constant 0 : i32
    return %arg0, %c0_i32 : i32, i32
  }
  func.func @transform_1(%arg0: i32) -> (i32, i32, i32) {
    %c0_i32 = arith.constant 0 : i32
    %c0_i32_0 = arith.constant 0 : i32
    %c0_i32_1 = arith.constant 0 : i32
    return %arg0, %c0_i32, %c0_i32_0 : i32, i32, i32
  }
  func.func @transform_2(%arg0: i32) -> (i32, i32, i32) {
    %c0_i32 = arith.constant 0 : i32
    %c0_i32_0 = arith.constant 0 : i32
    %c0_i32_1 = arith.constant 0 : i32
    return %arg0, %c0_i32, %c0_i32_0 : i32, i32, i32
  }
}

</mosaic_0001>

<llo_original>
// kernel: tpu_custom_call.1
$region0: #{tpu_custom_call.1}
  #allocation0 [shape = 'u32[]', space=smem, size = 0x4, offset = 0x4, fixed_abs, tag = 'smem constant byte address 0x4 - core index']
  #allocation1 [shape = 'u32[144,128]{1,0:T(1,128)}', space=vmem, size = 0x12000, scoped, tag = 'internal scratch']
  %s0 = inlined_call_operand.hbm [shape: f32[16,32], index: 0, kind: input, shape index: {}]
  %s1 = inlined_call_operand.hbm [shape: f32[1,1,32], index: 1, kind: output, shape index: {0}]
  %s2 = inlined_call_operand.hbm [shape: f32[1,1,32], index: 2, kind: output, shape index: {1}]
  %3 = xla_tuple %s1, %s2
  %s4 = sld [smem:[#allocation0]]
  $region26: #{tpu_custom_call.1} parent=0
    _
  %s6 = ssub.s32 1, %s4
  %s7 = scalar_select 0, %s6, %s4
  $region1: #{tpu_custom_call.1} parent=0
    #allocation2 [shape = 'u8[8192]{0}', space=vmem, size = 0x2000, scoped, tag = 'input window, operand 0, single buffered']
    #allocation3 [shape = 's32[1]{0}', space=sflag, size = 0x4, scoped, tag = 'scoped memory for tpu_custom_call.1']
    #allocation4 [shape = 's32[1]{0}', space=sflag, size = 0x4, scoped, tag = 'scoped memory for tpu_custom_call.1']
    #allocation5 [shape = 'u8[512]{0}', space=vmem, size = 0x400, scoped, tag = 'output window, operand 0, single buffered']
    #allocation6 [shape = 'u8[512]{0}', space=vmem, size = 0x400, scoped, tag = 'output window, operand 1, single buffered']
    #allocation7 [shape = 's32[1]{0}', space=sflag, size = 0x4, scoped, tag = 'scoped memory for tpu_custom_call.1']
    %8 = vsyncpa [#allocation3], 0
    %9 = vsyncpa [#allocation4], 0
    %10 = vsyncpa [#allocation7], 0
    // Predicated region
    $region2: #{tpu_custom_call.1} parent=1 // pred_check
      _
    $region3: #{tpu_custom_call.1} parent=1 // pred_check_branch
      %12 = sbr.rel (0) target = $region5
    $region4: #{tpu_custom_call.1} parent=1 // pred_region
      %s14 = ssub.s32 256, 256
      %15 = vsyncadd [#allocation3], %s14
      %s16 = sshll.u32 [#allocation2], 4
      %s17 = int_to_ptr.vmem [resolvable:$true] %s16
      %22 = dma.hbm_to_vmem [thread:$0]  %s0, 256, %s17, [#allocation3], 128, 128, 8
    $region5: #{tpu_custom_call.1} parent=1 // pred_fallthru
      _
    // Predicated region
    $region6: #{tpu_custom_call.1} parent=1 // pred_check
      _
    $region7: #{tpu_custom_call.1} parent=1 // pred_check_branch
      %24 = sbr.rel (0) target = $region9
    $region8: #{tpu_custom_call.1} parent=1 // pred_region
      %25 = dma.done [#allocation3], 256
    $region9: #{tpu_custom_call.1} parent=1 // pred_fallthru
      _
    %v26 = vld [vmem:[#allocation2] sm:$0xff]
    %v27 = vld [vmem:[#allocation2 + $0x8] sm:$0xff]
    %vm28 = vcmask 261120
    %v29 = vsel %vm28, %v26, 0.0
    %v30 = vsel %vm28, %v27, 0.0
    %v31 = vadd.f32 %v29, %v30
    %v32 = vrot.slane %v31, 4
    %v33 = vadd.f32 %v31, %v32
    %v34 = vrot.slane %v33, 2
    %v35 = vadd.f32 %v33, %v34
    %v36 = vrot.slane %v35, 1
    %v37 = vadd.f32 %v35, %v36
    %vm38 = vcmask 253952
    %39 = vst.msk [vmem:[#allocation5] sm:$0x1] %vm38, %v37
    %v40 = vmul.f32 %v26, %v26
    %v41 = vmul.f32 %v27, %v27
    %v42 = vsel %vm28, %v40, 0.0
    %v43 = vsel %vm28, %v41, 0.0
    %v44 = vadd.f32 %v42, %v43
    %v45 = vrot.slane %v44, 4
    %v46 = vadd.f32 %v44, %v45
    %v47 = vrot.slane %v46, 2
    %v48 = vadd.f32 %v46, %v47
    %v49 = vrot.slane %v48, 1
    %v50 = vadd.f32 %v48, %v49
    %51 = vst.msk [vmem:[#allocation6] sm:$0x1] %vm38, %v50
    // Predicated region
    $region10: #{tpu_custom_call.1} parent=1 // pred_check
      _
    $region11: #{tpu_custom_call.1} parent=1 // pred_check_branch
      %53 = sbr.rel (0) target = $region13
    $region12: #{tpu_custom_call.1} parent=1 // pred_region
      %s55 = ssub.s32 16, 16
      %56 = vsyncadd [#allocation4], %s55
      %s58 = sshll.u32 [#allocation5], 4
      %s59 = int_to_ptr.vmem [resolvable:$true] %s58
      %61 = dma.vmem_to_hbm [thread:$0]  %s59, 16, %s1, [#allocation4]
    $region13: #{tpu_custom_call.1} parent=1 // pred_fallthru
      _
    // Predicated region
    $region14: #{tpu_custom_call.1} parent=1 // pred_check
      _
    $region15: #{tpu_custom_call.1} parent=1 // pred_check_branch
      %63 = sbr.rel (0) target = $region17
    $region16: #{tpu_custom_call.1} parent=1 // pred_region
      %s65 = ssub.s32 16, 16
      %66 = vsyncadd [#allocation7], %s65
      %s68 = sshll.u32 [#allocation6], 4
      %s69 = int_to_ptr.vmem [resolvable:$true] %s68
      %71 = dma.vmem_to_hbm [thread:$0]  %s69, 16, %s2, [#allocation7]
    $region17: #{tpu_custom_call.1} parent=1 // pred_fallthru
      _
    // Predicated region
    $region18: #{tpu_custom_call.1} parent=1 // pred_check
      _
    $region19: #{tpu_custom_call.1} parent=1 // pred_check_branch
      %73 = sbr.rel (0) target = $region21
    $region20: #{tpu_custom_call.1} parent=1 // pred_region
      %74 = dma.done [#allocation4], 16
    $region21: #{tpu_custom_call.1} parent=1 // pred_fallthru
      _
    // Predicated region
    $region22: #{tpu_custom_call.1} parent=1 // pred_check
      _
    $region23: #{tpu_custom_call.1} parent=1 // pred_check_branch
      %76 = sbr.rel (0) target = $region25
    $region24: #{tpu_custom_call.1} parent=1 // pred_region
      %77 = dma.done [#allocation7], 16
    $region25: #{tpu_custom_call.1} parent=1 // pred_fallthru
      _
    %78 = vsyncpa [#allocation3], 1
    %79 = vsyncpa [#allocation4], 1
    %80 = vsyncpa [#allocation7], 1

</llo_original>
